<compile_context>
chip_gen: v7x
topology: tpu7x:2x2x1
jax: 0.10.0
libtpu: 0.0.40
codegen_flags: <defaults>
</compile_context>

<pallas_src>
import numpy as np
import jax
import jax.numpy as jnp
from jax.experimental import pallas as pl
from jax.experimental.pallas import tpu as pltpu


def _round_up(x, n):
    return ((x + n - 1) // n) * n


def _num_tensorcores():
    """Best-effort TensorCores-per-chip: 2 on v7x, 1 on v5e/v6e."""
    try:
        kind = (getattr(jax.devices()[0], "device_kind", "") or "").lower()
        if "v7" in kind or "7x" in kind:
            return 2
    except Exception:
        pass
    return 1


def _senclsf_kernel(z_ref, w_ref, b_ref, o_ref):
    # z_ref: (tm, E) native dtype   w_ref: (1, E)   b_ref: (1, 1)   o_ref: (tm, 1)
    # VPU multiply + XLU lane-reduce; f32 accumulation; cast only at writeback.
    z = z_ref[...].astype(jnp.float32)
    w = w_ref[...].astype(jnp.float32)               # lane-dense row, VMEM-resident
    s = jnp.sum(z * w, axis=-1, keepdims=True)       # (tm, 1)
    o_ref[...] = (s + b_ref[...].astype(jnp.float32)).astype(o_ref.dtype)


def senclsf_forward(z, weight, bias):
    """Pallas equivalent of SenClsf.forward: z @ weight.T + bias.

    z:      (..., emb_dim)   any float dtype (kept native, no HBM upcast)
    weight: (1, emb_dim)     torch nn.Linear layout
    bias:   (1,)
    returns (..., 1) in z's dtype (f32 accumulation internally)
    """
    z = jnp.asarray(z)
    lead = z.shape[:-1]
    e = z.shape[-1]
    z2 = z.reshape(-1, e)
    m = z2.shape[0]
    out_dtype = z2.dtype
    itemsize = z2.dtype.itemsize

    w_row = jnp.asarray(weight).reshape(1, e)        # lane-dense (1, E)
    b_mat = jnp.asarray(bias).reshape(1, 1)

    # ---- row-tile selection -------------------------------------------------
    # Sublane multiple depends on dtype packing: f32 -> 8, bf16 -> 16, int8 -> 32.
    sub = max(8, 32 // itemsize)

    if m <= sub:
        tm = m                                        # block equals full dim: allowed
    else:
        # VMEM budget: keep each z block <= ~4 MiB (x2 double-buffered), far under
        # the default scoped VMEM on v5e (16 MiB) and v6e/v7x (32 MiB).
        max_rows = (4 * 1024 * 1024) // max(1, e * itemsize)
        max_rows = max(sub, (max_rows // sub) * sub)
        tm = min(_round_up(m, sub), max_rows, 2048)
        tm = max(sub, tm)

        # Dual-TC v7x: aim for >=2 steps per core, but only if each tile stays
        # >= ~0.5 MiB so the per-step overhead stays amortized.  Single-TC
        # v5e/v6e keep the fewest, largest steps.
        ncores = _num_tensorcores()
        if ncores > 1 and pl.cdiv(m, tm) < 2 * ncores:
            cand = _round_up(pl.cdiv(m, 2 * ncores), sub)
            if cand >= sub and cand * e * itemsize >= 512 * 1024:
                tm = cand

    grid = (pl.cdiv(m, tm),)

    cost = pl.CostEstimate(
        flops=2 * m * e,
        transcendentals=0,
        bytes_accessed=m * e * itemsize
        + e * w_row.dtype.itemsize
        + m * out_dtype.itemsize,
    )

    out = pl.pallas_call(
        _senclsf_kernel,
        out_shape=jax.ShapeDtypeStruct((m, 1), out_dtype),
        grid=grid,
        in_specs=[
            pl.BlockSpec((tm, e), lambda i: (i, 0)),   # row tile of z (partial last block masked)
            pl.BlockSpec((1, e), lambda i: (0, 0)),    # weight row (resident)
            pl.BlockSpec((1, 1), lambda i: (0, 0)),    # bias       (resident)
        ],
        out_specs=pl.BlockSpec((tm, 1), lambda i: (i, 0)),
        compiler_params=pltpu.CompilerParams(
            dimension_semantics=("parallel",)),
        cost_estimate=cost,
    )(z2, w_row, b_mat)

    return out.reshape(*lead, 1)


if __name__ == "__main__":
    # Small, deterministic example: 256 "sentence embeddings" of width 64.
    num_rows, emb_dim = 256, 64
    key = jax.random.PRNGKey(0)
    kz, kw, kb = jax.random.split(key, 3)

    z = jax.random.normal(kz, (num_rows, emb_dim), dtype=jnp.float32)
    weight = 0.1 * jax.random.normal(kw, (1, emb_dim), dtype=jnp.float32)
    bias = jax.random.normal(kb, (1,), dtype=jnp.float32)

    out = senclsf_forward(z, weight, bias)
    out = jax.block_until_ready(out)

    # Independent reference of the same math (nn.Linear(emb_dim, 1) forward).
    ref = np.asarray(z, np.float64) @ np.asarray(weight, np.float64).T \
        + np.asarray(bias, np.float64)

    assert out.shape == (num_rows, 1), out.shape
    assert np.allclose(np.asarray(out, np.float64), ref, rtol=1e-3, atol=1e-3), \
        float(np.max(np.abs(np.asarray(out, np.float64) - ref)))
    print("KERNEL_OK")
</pallas_src>

<mosaic_0001>
module attributes {stable_mosaic.version = 11 : i64} {
  func.func @_senclsf_kernel(%arg0: i32, %arg1: memref<256x64xf32, #tpu.memory_space<vmem>>, %arg2: memref<1x64xf32, #tpu.memory_space<vmem>>, %arg3: memref<1x1xf32, #tpu.memory_space<vmem>>, %arg4: memref<256x1xf32, #tpu.memory_space<vmem>>) attributes {dimension_semantics = [#tpu.dimension_semantics<parallel>], iteration_bounds = array<i64: 1>, scalar_prefetch = 0 : i64, scratch_operands = 0 : i64, tpu.core_type = #tpu.core_type<tc>, window_params = [{transform_indices = @transform_0, window_bounds = array<i64: 256, 64>}, {pipeline_mode = #tpu.pipeline_mode<synchronous>, transform_indices = @transform_1, window_bounds = array<i64: 1, 64>}, {pipeline_mode = #tpu.pipeline_mode<synchronous>, transform_indices = @transform_2, window_bounds = array<i64: 1, 1>}, {transform_indices = @transform_3, window_bounds = array<i64: 256, 1>}]} {
    %c0 = arith.constant 0 : index
    %c0_0 = arith.constant 0 : index
    %0 = vector.load %arg1[%c0, %c0_0] : memref<256x64xf32, #tpu.memory_space<vmem>>, vector<256x64xf32>
    %c0_1 = arith.constant 0 : index
    %c0_2 = arith.constant 0 : index
    %1 = vector.load %arg2[%c0_1, %c0_2] : memref<1x64xf32, #tpu.memory_space<vmem>>, vector<1x64xf32>
    %2 = vector.broadcast %1 : vector<1x64xf32> to vector<256x64xf32>
    %3 = arith.mulf %0, %2 : vector<256x64xf32>
    %cst = arith.constant dense<0.000000e+00> : vector<256xf32>
    %4 = vector.multi_reduction <add>, %3, %cst [1] : vector<256x64xf32> to vector<256xf32>
    %5 = vector.shape_cast %4 : vector<256xf32> to vector<256x1xf32>
    %c0_3 = arith.constant 0 : index
    %c0_4 = arith.constant 0 : index
    %6 = vector.load %arg3[%c0_3, %c0_4] : memref<1x1xf32, #tpu.memory_space<vmem>>, vector<1x1xf32>
    %7 = vector.broadcast %6 : vector<1x1xf32> to vector<256x1xf32>
    %8 = arith.addf %5, %7 : vector<256x1xf32>
    %c0_5 = arith.constant 0 : index
    %c0_6 = arith.constant 0 : index
    %9 = vector.load %arg4[%c0_5, %c0_6] : memref<256x1xf32, #tpu.memory_space<vmem>>, vector<256x1xf32>
    tpu.vector_store %arg4[%c0_5, %c0_6], %8 {strides = array<i32>} : memref<256x1xf32, #tpu.memory_space<vmem>>, vector<256x1xf32>,
    return
  }
  func.func @transform_0(%arg0: i32) -> (i32, i32) {
    %c0_i32 = arith.constant 0 : i32
    %c0_i32_0 = arith.constant 0 : i32
    return %arg0, %c0_i32 : i32, i32
  }
  func.func @transform_1(%arg0: i32) -> (i32, i32) {
    %c0_i32 = arith.constant 0 : i32
    %c0_i32_0 = arith.constant 0 : i32
    %c0_i32_1 = arith.constant 0 : i32
    return %c0_i32, %c0_i32_0 : i32, i32
  }
  func.func @transform_2(%arg0: i32) -> (i32, i32) {
    %c0_i32 = arith.constant 0 : i32
    %c0_i32_0 = arith.constant 0 : i32
    %c0_i32_1 = arith.constant 0 : i32
    return %c0_i32, %c0_i32_0 : i32, i32
  }
  func.func @transform_3(%arg0: i32) -> (i32, i32) {
    %c0_i32 = arith.constant 0 : i32
    %c0_i32_0 = arith.constant 0 : i32
    return %arg0, %c0_i32 : i32, i32
  }
}

</mosaic_0001>

<llo_original>
// kernel: tpu_custom_call.1
$region0: #{tpu_custom_call.1}
  #allocation0 [shape = 'u32[]', space=smem, size = 0x4, offset = 0x4, fixed_abs, tag = 'smem constant byte address 0x4 - core index']
  #allocation1 [shape = 'u32[144,128]{1,0:T(1,128)}', space=vmem, size = 0x12000, scoped, tag = 'internal scratch']
  #allocation2 [shape = 'f32[1,1]{1,0:T(1,128)S(1)}', space=vmem, size = 0x200, scoped, tag = 'scoped memory for tpu_custom_call.1']
  %s0 = inlined_call_operand.vmem [shape: f32[256,64], index: 0, kind: input, shape index: {}]
  %s1 = inlined_call_operand.vmem [shape: f32[1,64], index: 1, kind: input, shape index: {}]
  %s2 = inlined_call_operand.<no memory space> [shape: f32[1,1], index: 2, kind: input, shape index: {}]
  %s3 = inlined_call_operand.vmem [shape: f32[256,1], index: 3, kind: output, shape index: {}]
  %s4 = sld [smem:[#allocation0]]
  $region22: #{tpu_custom_call.1} parent=0
    _
  %s6 = ssub.s32 1, %s4
  %s7 = scalar_select 0, %s6, %s4
  %v8 = vstv %s2
  %9 = vst [vmem:[#allocation2] sm:$0x1] %v8
  // Predicated region
  $region2: #{tpu_custom_call.1} parent=0 // pred_check
    _
  $region3: #{tpu_custom_call.1} parent=0 // pred_check_branch
    %11 = sbr.rel (0) target = $region5
  $region4: #{tpu_custom_call.1} parent=0 // pred_region
    _
  $region5: #{tpu_custom_call.1} parent=0 // pred_fallthru
    _
  // Predicated region
  $region6: #{tpu_custom_call.1} parent=0 // pred_check
    _
  $region7: #{tpu_custom_call.1} parent=0 // pred_check_branch
    %13 = sbr.rel (0) target = $region9
  $region8: #{tpu_custom_call.1} parent=0 // pred_region
    _
  $region9: #{tpu_custom_call.1} parent=0 // pred_fallthru
    _
  // Predicated region
  $region10: #{tpu_custom_call.1} parent=0 // pred_check
    _
  $region11: #{tpu_custom_call.1} parent=0 // pred_check_branch
    %15 = sbr.rel (0) target = $region13
  $region12: #{tpu_custom_call.1} parent=0 // pred_region
    _
  $region13: #{tpu_custom_call.1} parent=0 // pred_fallthru
    _
  %v16 = vld [vmem:[%s0] sm:$0xff]
  %v17 = vld [vmem:[%s0 + $0x8] sm:$0xff]
  %v18 = vld [vmem:[%s0 + $0x10] sm:$0xff]
  %v19 = vld [vmem:[%s0 + $0x18] sm:$0xff]
  %v20 = vld [vmem:[%s0 + $0x20] sm:$0xff]
  %v21 = vld [vmem:[%s0 + $0x28] sm:$0xff]
  %v22 = vld [vmem:[%s0 + $0x30] sm:$0xff]
  %v23 = vld [vmem:[%s0 + $0x38] sm:$0xff]
  %v24 = vld [vmem:[%s0 + $0x40] sm:$0xff]
  %v25 = vld [vmem:[%s0 + $0x48] sm:$0xff]
  %v26 = vld [vmem:[%s0 + $0x50] sm:$0xff]
  %v27 = vld [vmem:[%s0 + $0x58] sm:$0xff]
  %v28 = vld [vmem:[%s0 + $0x60] sm:$0xff]
  %v29 = vld [vmem:[%s0 + $0x68] sm:$0xff]
  %v30 = vld [vmem:[%s0 + $0x70] sm:$0xff]
  %v31 = vld [vmem:[%s0 + $0x78] sm:$0xff]
  %v32 = vld [vmem:[%s0 + $0x80] sm:$0xff]
  %v33 = vld [vmem:[%s0 + $0x88] sm:$0xff]
  %v34 = vld [vmem:[%s0 + $0x90] sm:$0xff]
  %v35 = vld [vmem:[%s0 + $0x98] sm:$0xff]
  %v36 = vld [vmem:[%s0 + $0xa0] sm:$0xff]
  %v37 = vld [vmem:[%s0 + $0xa8] sm:$0xff]
  %v38 = vld [vmem:[%s0 + $0xb0] sm:$0xff]
  %v39 = vld [vmem:[%s0 + $0xb8] sm:$0xff]
  %v40 = vld [vmem:[%s0 + $0xc0] sm:$0xff]
  %v41 = vld [vmem:[%s0 + $0xc8] sm:$0xff]
  %v42 = vld [vmem:[%s0 + $0xd0] sm:$0xff]
  %v43 = vld [vmem:[%s0 + $0xd8] sm:$0xff]
  %v44 = vld [vmem:[%s0 + $0xe0] sm:$0xff]
  %v45 = vld [vmem:[%s0 + $0xe8] sm:$0xff]
  %v46 = vld [vmem:[%s0 + $0xf0] sm:$0xff]
  %v47 = vld [vmem:[%s0 + $0xf8] sm:$0xff]
  %v48 = vld [vmem:[%s1] sm:$0x1]
  %v50 = vlaneseq
  %v51 = vshrl.u32 %v50, 7
  %v52 = vsub.s32 0, %v51
  %v53 = vrot.slane %v48, %v52
  %v55 = vmul.f32 %v16, %v53
  %v56 = vmul.f32 %v17, %v53
  %v57 = vmul.f32 %v18, %v53
  %v58 = vmul.f32 %v19, %v53
  %v59 = vmul.f32 %v20, %v53
  %v60 = vmul.f32 %v21, %v53
  %v61 = vmul.f32 %v22, %v53
  %v62 = vmul.f32 %v23, %v53
  %v63 = vmul.f32 %v24, %v53
  %v64 = vmul.f32 %v25, %v53
  %v65 = vmul.f32 %v26, %v53
  %v66 = vmul.f32 %v27, %v53
  %v67 = vmul.f32 %v28, %v53
  %v68 = vmul.f32 %v29, %v53
  %v69 = vmul.f32 %v30, %v53
  %v70 = vmul.f32 %v31, %v53
  %v71 = vmul.f32 %v32, %v53
  %v72 = vmul.f32 %v33, %v53
  %v73 = vmul.f32 %v34, %v53
  %v74 = vmul.f32 %v35, %v53
  %v75 = vmul.f32 %v36, %v53
  %v76 = vmul.f32 %v37, %v53
  %v77 = vmul.f32 %v38, %v53
  %v78 = vmul.f32 %v39, %v53
  %v79 = vmul.f32 %v40, %v53
  %v80 = vmul.f32 %v41, %v53
  %v81 = vmul.f32 %v42, %v53
  %v82 = vmul.f32 %v43, %v53
  %v83 = vmul.f32 %v44, %v53
  %v84 = vmul.f32 %v45, %v53
  %v85 = vmul.f32 %v46, %v53
  %v86 = vmul.f32 %v47, %v53
  %vm87 = vcmask 523264
  %v88 = vsel %vm87, %v55, 0.0
  %89 = vadd.xlane.f32.xlu0 %v88
  %v90 = vpop.xlane.xlu0 %89
  %v91 = vsel %vm87, %v56, 0.0
  %92 = vadd.xlane.f32.xlu0 %v91
  %v93 = vpop.xlane.xlu0 %92
  %v94 = vsel %vm87, %v57, 0.0
  %95 = vadd.xlane.f32.xlu0 %v94
  %v96 = vpop.xlane.xlu0 %95
  %v97 = vsel %vm87, %v58, 0.0
  %98 = vadd.xlane.f32.xlu0 %v97
  %v99 = vpop.xlane.xlu0 %98
  %v100 = vsel %vm87, %v59, 0.0
  %101 = vadd.xlane.f32.xlu0 %v100
  %v102 = vpop.xlane.xlu0 %101
  %v103 = vsel %vm87, %v60, 0.0
  %104 = vadd.xlane.f32.xlu0 %v103
  %v105 = vpop.xlane.xlu0 %104
  %v106 = vsel %vm87, %v61, 0.0
  %107 = vadd.xlane.f32.xlu0 %v106
  %v108 = vpop.xlane.xlu0 %107
  %v109 = vsel %vm87, %v62, 0.0
  %110 = vadd.xlane.f32.xlu0 %v109
  %v111 = vpop.xlane.xlu0 %110
  %v112 = vsel %vm87, %v63, 0.0
  %113 = vadd.xlane.f32.xlu0 %v112
  %v114 = vpop.xlane.xlu0 %113
  %v115 = vsel %vm87, %v64, 0.0
  %116 = vadd.xlane.f32.xlu0 %v115
  %v117 = vpop.xlane.xlu0 %116
  %v118 = vsel %vm87, %v65, 0.0
  %119 = vadd.xlane.f32.xlu0 %v118
  %v120 = vpop.xlane.xlu0 %119
  %v121 = vsel %vm87, %v66, 0.0
  %122 = vadd.xlane.f32.xlu0 %v121
  %v123 = vpop.xlane.xlu0 %122
  %v124 = vsel %vm87, %v67, 0.0
  %125 = vadd.xlane.f32.xlu0 %v124
  %v126 = vpop.xlane.xlu0 %125
  %v127 = vsel %vm87, %v68, 0.0
  %128 = vadd.xlane.f32.xlu0 %v127
  %v129 = vpop.xlane.xlu0 %128
  %v130 = vsel %vm87, %v69, 0.0
  %131 = vadd.xlane.f32.xlu0 %v130
  %v132 = vpop.xlane.xlu0 %131
  %v133 = vsel %vm87, %v70, 0.0
  %134 = vadd.xlane.f32.xlu0 %v133
  %v135 = vpop.xlane.xlu0 %134
  %v136 = vsel %vm87, %v71, 0.0
  %137 = vadd.xlane.f32.xlu0 %v136
  %v138 = vpop.xlane.xlu0 %137
  %v139 = vsel %vm87, %v72, 0.0
  %140 = vadd.xlane.f32.xlu0 %v139
  %v141 = vpop.xlane.xlu0 %140
  %v142 = vsel %vm87, %v73, 0.0
  %143 = vadd.xlane.f32.xlu0 %v142
  %v144 = vpop.xlane.xlu0 %143
  %v145 = vsel %vm87, %v74, 0.0
  %146 = vadd.xlane.f32.xlu0 %v145
  %v147 = vpop.xlane.xlu0 %146
  %v148 = vsel %vm87, %v75, 0.0
  %149 = vadd.xlane.f32.xlu0 %v148
  %v150 = vpop.xlane.xlu0 %149
  %v151 = vsel %vm87, %v76, 0.0
  %152 = vadd.xlane.f32.xlu0 %v151
  %v153 = vpop.xlane.xlu0 %152
  %v154 = vsel %vm87, %v77, 0.0
  %155 = vadd.xlane.f32.xlu0 %v154
  %v156 = vpop.xlane.xlu0 %155
  %v157 = vsel %vm87, %v78, 0.0
  %158 = vadd.xlane.f32.xlu0 %v157
  %v159 = vpop.xlane.xlu0 %158
  %v160 = vsel %vm87, %v79, 0.0
  %161 = vadd.xlane.f32.xlu0 %v160
  %v162 = vpop.xlane.xlu0 %161
  %v163 = vsel %vm87, %v80, 0.0
  %164 = vadd.xlane.f32.xlu0 %v163
  %v165 = vpop.xlane.xlu0 %164
  %v166 = vsel %vm87, %v81, 0.0
  %167 = vadd.xlane.f32.xlu0 %v166
  %v168 = vpop.xlane.xlu0 %167
  %v169 = vsel %vm87, %v82, 0.0
  %170 = vadd.xlane.f32.xlu0 %v169
  %v171 = vpop.xlane.xlu0 %170
  %v172 = vsel %vm87, %v83, 0.0
  %173 = vadd.xlane.f32.xlu0 %v172
  %v174 = vpop.xlane.xlu0 %173
  %v175 = vsel %vm87, %v84, 0.0
  %176 = vadd.xlane.f32.xlu0 %v175
  %v177 = vpop.xlane.xlu0 %176
  %v178 = vsel %vm87, %v85, 0.0
  %179 = vadd.xlane.f32.xlu0 %v178
  %v180 = vpop.xlane.xlu0 %179
  %v181 = vsel %vm87, %v86, 0.0
  %182 = vadd.xlane.f32.xlu0 %v181
  %v183 = vpop.xlane.xlu0 %182
  %v184 = vld [vmem:[#allocation2] sm:$0x1]
  %v186 = vlaneseq
  %v187 = vshrl.u32 %v186, 7
  %v188 = vsub.s32 0, %v187
  %v189 = vrot.slane %v184, %v188
  %v191 = vadd.f32 %v90, %v189
  %v192 = vadd.f32 %v93, %v189
  %v193 = vadd.f32 %v96, %v189
  %v194 = vadd.f32 %v99, %v189
  %v195 = vadd.f32 %v102, %v189
  %v196 = vadd.f32 %v105, %v189
  %v197 = vadd.f32 %v108, %v189
  %v198 = vadd.f32 %v111, %v189
  %v199 = vadd.f32 %v114, %v189
  %v200 = vadd.f32 %v117, %v189
  %v201 = vadd.f32 %v120, %v189
  %v202 = vadd.f32 %v123, %v189
  %v203 = vadd.f32 %v126, %v189
  %v204 = vadd.f32 %v129, %v189
  %v205 = vadd.f32 %v132, %v189
  %v206 = vadd.f32 %v135, %v189
  %v207 = vadd.f32 %v138, %v189
  %v208 = vadd.f32 %v141, %v189
  %v209 = vadd.f32 %v144, %v189
  %v210 = vadd.f32 %v147, %v189
  %v211 = vadd.f32 %v150, %v189
  %v212 = vadd.f32 %v153, %v189
  %v213 = vadd.f32 %v156, %v189
  %v214 = vadd.f32 %v159, %v189
  %v215 = vadd.f32 %v162, %v189
  %v216 = vadd.f32 %v165, %v189
  %v217 = vadd.f32 %v168, %v189
  %v218 = vadd.f32 %v171, %v189
  %v219 = vadd.f32 %v174, %v189
  %v220 = vadd.f32 %v177, %v189
  %v221 = vadd.f32 %v180, %v189
  %v222 = vadd.f32 %v183, %v189
  %vm223 = vcmask 7168
  %224 = vst.msk [vmem:[%s3] sm:$0xff] %vm223, %v191
  %225 = vst.msk [vmem:[%s3 + $0x8] sm:$0xff] %vm223, %v192
  %226 = vst.msk [vmem:[%s3 + $0x10] sm:$0xff] %vm223, %v193
  %227 = vst.msk [vmem:[%s3 + $0x18] sm:$0xff] %vm223, %v194
  %228 = vst.msk [vmem:[%s3 + $0x20] sm:$0xff] %vm223, %v195
  %229 = vst.msk [vmem:[%s3 + $0x28] sm:$0xff] %vm223, %v196
  %230 = vst.msk [vmem:[%s3 + $0x30] sm:$0xff] %vm223, %v197
  %231 = vst.msk [vmem:[%s3 + $0x38] sm:$0xff] %vm223, %v198
  %232 = vst.msk [vmem:[%s3 + $0x40] sm:$0xff] %vm223, %v199
  %233 = vst.msk [vmem:[%s3 + $0x48] sm:$0xff] %vm223, %v200
  %234 = vst.msk [vmem:[%s3 + $0x50] sm:$0xff] %vm223, %v201
  %235 = vst.msk [vmem:[%s3 + $0x58] sm:$0xff] %vm223, %v202
  %236 = vst.msk [vmem:[%s3 + $0x60] sm:$0xff] %vm223, %v203
  %237 = vst.msk [vmem:[%s3 + $0x68] sm:$0xff] %vm223, %v204
  %238 = vst.msk [vmem:[%s3 + $0x70] sm:$0xff] %vm223, %v205
  %239 = vst.msk [vmem:[%s3 + $0x78] sm:$0xff] %vm223, %v206
  %240 = vst.msk [vmem:[%s3 + $0x80] sm:$0xff] %vm223, %v207
  %241 = vst.msk [vmem:[%s3 + $0x88] sm:$0xff] %vm223, %v208
  %242 = vst.msk [vmem:[%s3 + $0x90] sm:$0xff] %vm223, %v209
  %243 = vst.msk [vmem:[%s3 + $0x98] sm:$0xff] %vm223, %v210
  %244 = vst.msk [vmem:[%s3 + $0xa0] sm:$0xff] %vm223, %v211
  %245 = vst.msk [vmem:[%s3 + $0xa8] sm:$0xff] %vm223, %v212
  %246 = vst.msk [vmem:[%s3 + $0xb0] sm:$0xff] %vm223, %v213
  %247 = vst.msk [vmem:[%s3 + $0xb8] sm:$0xff] %vm223, %v214
  %248 = vst.msk [vmem:[%s3 + $0xc0] sm:$0xff] %vm223, %v215
  %249 = vst.msk [vmem:[%s3 + $0xc8] sm:$0xff] %vm223, %v216
  %250 = vst.msk [vmem:[%s3 + $0xd0] sm:$0xff] %vm223, %v217
  %251 = vst.msk [vmem:[%s3 + $0xd8] sm:$0xff] %vm223, %v218
  %252 = vst.msk [vmem:[%s3 + $0xe0] sm:$0xff] %vm223, %v219
  %253 = vst.msk [vmem:[%s3 + $0xe8] sm:$0xff] %vm223, %v220
  %254 = vst.msk [vmem:[%s3 + $0xf0] sm:$0xff] %vm223, %v221
  %255 = vst.msk [vmem:[%s3 + $0xf8] sm:$0xff] %vm223, %v222
  // Predicated region
  $region14: #{tpu_custom_call.1} parent=0 // pred_check
    _
  $region15: #{tpu_custom_call.1} parent=0 // pred_check_branch
    %257 = sbr.rel (0) target = $region17
  $region16: #{tpu_custom_call.1} parent=0 // pred_region
    _
  $region17: #{tpu_custom_call.1} parent=0 // pred_fallthru
    _
  // Predicated region
  $region18: #{tpu_custom_call.1} parent=0 // pred_check
    _
  $region19: #{tpu_custom_call.1} parent=0 // pred_check_branch
    %259 = sbr.rel (0) target = $region21
  $region20: #{tpu_custom_call.1} parent=0 // pred_region
    _
  $region21: #{tpu_custom_call.1} parent=0 // pred_fallthru
    _

</llo_original>
